<compile_context>
chip_gen: v7x
topology: tpu7x:2x2x1
jax: 0.10.0
libtpu: 0.0.40
codegen_flags: <defaults>
</compile_context>

<pallas_src>
import jax
import jax.numpy as jnp
from jax import lax
from jax.experimental import pallas as pl
from jax.experimental.pallas import tpu as pltpu

LANES = 128                       # vreg lane width
SUBLANES = 8                      # f32 vreg sublanes
CHUNK_ROWS = 128                  # (128,128) f32 = 16 vregs per intermediate
CHUNK_UNROLL = 2                  # interleave 2 chunks for LLO scheduling
BLOCK_BYTES = 4 * 1024 * 1024     # per-input, per-pipeline-buffer DMA target
VMEM_LIMIT_BYTES = 32 * 1024 * 1024
APPROX_RECIPROCAL = True          # ~1e-4 rel. err on the exp(-|x|) term only


def _num_tensorcores():
    """2 TensorCores per chip only on v7x; 1 on v5e/v6e."""
    try:
        kind = jax.devices()[0].device_kind.lower()
    except Exception:
        return 1
    return 2 if ("v7" in kind or "tpu7" in kind) else 1


def _make_kernel(block_rows, tiles_per_core, valid_rows_full, valid_lane_rem):
    """valid_rows_full: number of rows whose 128 lanes are all valid.
    valid_lane_rem: number of valid lanes in row `valid_rows_full` (0 if none)."""
    n_chunks, rem_rows = divmod(block_rows, CHUNK_ROWS)

    def kernel(p_ref, t_ref, o_ref):
        core = pl.program_id(0)
        t = pl.program_id(1)

        @pl.when(t == 0)
        def _():
            o_ref[...] = jnp.zeros_like(o_ref)

        # Global row offset of this block (unclamped; virtual tiles of the core
        # split land past the valid region and take the masked path -> +0).
        row_start = (core * tiles_per_core + t) * block_rows

        def cosh_fold(r0, nrows, mask):
            pv = p_ref[pl.ds(r0, nrows), :].astype(jnp.float32)
            tv = t_ref[pl.ds(r0, nrows), :].astype(jnp.float32)
            # cosh(x) = 0.5*(e + 1/e), e = exp(|x|): one EUP exp + one EUP recip.
            e = jnp.exp(jnp.abs(pv - tv))
            inv = pl.reciprocal(e, approx=APPROX_RECIPROCAL)
            c = 0.5 * (e + inv)
            if mask is not None:
                c = jnp.where(mask, c, 0.0)
            # Fold (nrows,128) -> (8,128) with pure VALU adds (no XLU in hot loop).
            return c.reshape(nrows // SUBLANES, SUBLANES, LANES).sum(axis=0)

        def full_sum():
            part = jnp.zeros((SUBLANES, LANES), jnp.float32)
            if n_chunks > 0:
                def fchunk(k, acc):
                    r0 = pl.multiple_of(k * CHUNK_ROWS, CHUNK_ROWS)
                    return acc + cosh_fold(r0, CHUNK_ROWS, None)
                part = lax.fori_loop(0, n_chunks, fchunk, part,
                                     unroll=CHUNK_UNROLL)
            if rem_rows:
                part = part + cosh_fold(n_chunks * CHUNK_ROWS, rem_rows, None)
            return part

        def masked_sum():
            def mask_for(r0, riota_c, liota_c):
                grow = (row_start + r0) + riota_c      # global row index
                ok = grow < valid_rows_full
                if valid_lane_rem:
                    ok = ok | ((grow == valid_rows_full)
                               & (liota_c < valid_lane_rem))
                return ok

            part = jnp.zeros((SUBLANES, LANES), jnp.float32)
            if n_chunks > 0:
                # Iotas hoisted out of the chunk loop.
                riota = lax.broadcasted_iota(jnp.int32, (CHUNK_ROWS, LANES), 0)
                liota = lax.broadcasted_iota(jnp.int32, (CHUNK_ROWS, LANES), 1)

                def mchunk(k, acc):
                    r0 = pl.multiple_of(k * CHUNK_ROWS, CHUNK_ROWS)
                    return acc + cosh_fold(r0, CHUNK_ROWS,
                                           mask_for(r0, riota, liota))
                part = lax.fori_loop(0, n_chunks, mchunk, part)
            if rem_rows:
                r0 = n_chunks * CHUNK_ROWS
                riota_r = lax.broadcasted_iota(jnp.int32, (rem_rows, LANES), 0)
                liota_r = lax.broadcasted_iota(jnp.int32, (rem_rows, LANES), 1)
                part = part + cosh_fold(r0, rem_rows,
                                        mask_for(r0, riota_r, liota_r))
            return part

        # Only the last real tile (ragged) and virtual tiles need masking.
        is_full = (row_start + block_rows) <= valid_rows_full

        @pl.when(is_full)
        def _():
            o_ref[...] += full_sum()

        @pl.when(jnp.logical_not(is_full))
        def _():
            o_ref[...] += masked_sum()

    return kernel


def hyperbolic_cosine_loss(preds, targets):
    assert preds.shape == targets.shape, "preds/targets must have matching shapes"
    n = preds.size
    out_dtype = jnp.promote_types(preds.dtype, targets.dtype)
    if n == 0:
        return jnp.asarray(jnp.nan, out_dtype)  # torch.mean of empty -> nan

    flat_p = preds.reshape(-1)   # free reshape
    flat_t = targets.reshape(-1)

    vreg_elems = SUBLANES * LANES                 # 1024
    bulk = (n // vreg_elems) * vreg_elems         # 1024-aligned prefix
    tail_sum = jnp.zeros((), jnp.float32)

    if bulk == 0:
        # Tiny input (<1024 elems): pad a single vreg; kernel masks the pad.
        pad = vreg_elems - n
        p2d = jnp.pad(flat_p, (0, pad)).reshape(SUBLANES, LANES)
        t2d = jnp.pad(flat_t, (0, pad)).reshape(SUBLANES, LANES)
        rows = SUBLANES
        valid_rows_full, valid_lane_rem = divmod(n, LANES)
    else:
        # Aligned bulk streamed by the kernel (zero-copy when n % 1024 == 0);
        # the <1024-element tail is reduced with plain jnp.
        if bulk < n:
            tp = flat_p[bulk:].astype(jnp.float32)
            tt = flat_t[bulk:].astype(jnp.float32)
            tail_sum = jnp.sum(jnp.cosh(tp - tt))
            flat_p = flat_p[:bulk]
            flat_t = flat_t[:bulk]
        rows = bulk // LANES                      # multiple of 8 by construction
        p2d = flat_p.reshape(rows, LANES)
        t2d = flat_t.reshape(rows, LANES)
        valid_rows_full, valid_lane_rem = rows, 0

    # Dtype-aware block size: ~BLOCK_BYTES per input per pipeline buffer.
    itemsize = max(jnp.dtype(preds.dtype).itemsize,
                   jnp.dtype(targets.dtype).itemsize)
    target_rows = max(SUBLANES, BLOCK_BYTES // (LANES * itemsize))
    if rows <= target_rows:
        block_rows = rows                         # single tile
    else:
        block_rows = (target_rows // SUBLANES) * SUBLANES

    total_tiles = -(-rows // block_rows)
    ncores = min(_num_tensorcores(), total_tiles)
    tiles_per_core = -(-total_tiles // ncores)

    def in_index(p, t):
        v = p * tiles_per_core + t
        if ncores > 1:
            # Clamp virtual (beyond-the-end) tiles of the core split onto the
            # last real tile; the kernel masks their contribution to zero.
            v = jnp.minimum(v, total_tiles - 1)
        return (v, 0)

    partials = pl.pallas_call(
        _make_kernel(block_rows, tiles_per_core, valid_rows_full, valid_lane_rem),
        out_shape=jax.ShapeDtypeStruct((ncores * SUBLANES, LANES), jnp.float32),
        grid_spec=pltpu.PrefetchScalarGridSpec(
            num_scalar_prefetch=0,
            grid=(ncores, tiles_per_core),
            in_specs=[
                pl.BlockSpec((block_rows, LANES), in_index),
                pl.BlockSpec((block_rows, LANES), in_index),
            ],
            out_specs=pl.BlockSpec((SUBLANES, LANES), lambda p, t: (p, 0)),
        ),
        compiler_params=pltpu.CompilerParams(
            dimension_semantics=("parallel", "arbitrary"),
            vmem_limit_bytes=VMEM_LIMIT_BYTES,
        ),
    )(p2d, t2d)

    total = jnp.sum(partials) + tail_sum          # tiny final cross-lane reduce
    mean = total / jnp.float32(n)
    return mean.astype(out_dtype)


if __name__ == "__main__":
    key = jax.random.PRNGKey(0)
    k1, k2, k3, k4, k5, k6, k7, k8 = jax.random.split(key, 8)

    def check(p, t, rtol):
        got = jax.block_until_ready(hyperbolic_cosine_loss(p, t))
        ref = jnp.mean(jnp.cosh(p.astype(jnp.float32) - t.astype(jnp.float32)))
        assert jnp.allclose(got.astype(jnp.float32), ref, rtol=rtol, atol=rtol), (got, ref)

    # 1) Shapes consistent with the regression loss: (batch, horizon) = (8, 5)
    #    -> tiny (<1024 elems) path, masked single tile.
    check(jax.random.normal(k1, (8, 5), dtype=jnp.float32),
          jax.random.normal(k2, (8, 5), dtype=jnp.float32), rtol=1e-4)

    # 2) 1024-aligned bulk, single full (unmasked) tile, chunk loop + unroll.
    check(jax.random.normal(k3, (512, 1030), dtype=jnp.float32),
          jax.random.normal(k4, (512, 1030), dtype=jnp.float32), rtol=1e-4)

    # 3) Multi-tile with ragged final block (masked path) and core-split logic.
    check(jax.random.normal(k5, (1200, 1024), dtype=jnp.float32),
          jax.random.normal(k6, (1200, 1024), dtype=jnp.float32), rtol=1e-4)

    # 4) Unaligned element count -> aligned bulk in-kernel + jnp tail.
    check(jax.random.normal(k7, (300, 413), dtype=jnp.bfloat16),
          jax.random.normal(k8, (300, 413), dtype=jnp.bfloat16), rtol=2e-2)

    print("KERNEL_OK")
</pallas_src>

<mosaic_0001>
module attributes {stable_mosaic.version = 11 : i64} {
  func.func @kernel(%arg0: i32, %arg1: i32, %arg2: memref<8x128xf32, #tpu.memory_space<vmem>>, %arg3: memref<8x128xf32, #tpu.memory_space<vmem>>, %arg4: memref<8x128xf32, #tpu.memory_space<vmem>>) attributes {dimension_semantics = [#tpu.dimension_semantics<parallel>, #tpu.dimension_semantics<arbitrary>], iteration_bounds = array<i64: 1, 1>, scalar_prefetch = 0 : i64, scratch_operands = 0 : i64, tpu.core_type = #tpu.core_type<tc>, window_params = [{transform_indices = @transform_0, window_bounds = array<i64: 8, 128>}, {transform_indices = @transform_1, window_bounds = array<i64: 8, 128>}, {transform_indices = @transform_2, window_bounds = array<i64: 8, 128>}]} {
    %c0_i32 = arith.constant 0 : i32
    %0 = arith.cmpi eq, %arg1, %c0_i32 : i32
    %1 = arith.extui %0 : i1 to i32
    %c0_i32_0 = arith.constant 0 : i32
    %2 = arith.cmpi ne, %1, %c0_i32_0 : i32
    scf.if %2 {
      %cst = arith.constant 0.000000e+00 : f32
      %13 = vector.broadcast %cst : f32 to vector<8x128xf32>
      %c0 = arith.constant 0 : index
      %c0_5 = arith.constant 0 : index
      %14 = vector.load %arg4[%c0, %c0_5] : memref<8x128xf32, #tpu.memory_space<vmem>>, vector<8x128xf32>
      tpu.vector_store %arg4[%c0, %c0_5], %13 {strides = array<i32>} : memref<8x128xf32, #tpu.memory_space<vmem>>, vector<8x128xf32>,
    } else {
    }
    %c1_i32 = arith.constant 1 : i32
    %3 = arith.muli %arg0, %c1_i32 : i32
    %4 = arith.addi %3, %arg1 : i32
    %c8_i32 = arith.constant 8 : i32
    %5 = arith.muli %4, %c8_i32 : i32
    %c8_i32_1 = arith.constant 8 : i32
    %6 = arith.addi %5, %c8_i32_1 : i32
    %c0_i32_2 = arith.constant 0 : i32
    %7 = arith.cmpi sle, %6, %c0_i32_2 : i32
    %8 = arith.extui %7 : i1 to i32
    %c0_i32_3 = arith.constant 0 : i32
    %9 = arith.cmpi ne, %8, %c0_i32_3 : i32
    scf.if %9 {
      %c0 = arith.constant 0 : index
      %c0_5 = arith.constant 0 : index
      %13 = vector.load %arg4[%c0, %c0_5] : memref<8x128xf32, #tpu.memory_space<vmem>>, vector<8x128xf32>
      %cst = arith.constant 0.000000e+00 : f32
      %14 = vector.broadcast %cst : f32 to vector<8x128xf32>
      %c0_6 = arith.constant 0 : index
      %c0_7 = arith.constant 0 : index
      %15 = vector.load %arg2[%c0_6, %c0_7] : memref<8x128xf32, #tpu.memory_space<vmem>>, vector<8x128xf32>
      %c0_8 = arith.constant 0 : index
      %c0_9 = arith.constant 0 : index
      %16 = vector.load %arg3[%c0_8, %c0_9] : memref<8x128xf32, #tpu.memory_space<vmem>>, vector<8x128xf32>
      %17 = arith.subf %15, %16 : vector<8x128xf32>
      %18 = math.absf %17 : vector<8x128xf32>
      %19 = math.exp %18 : vector<8x128xf32>
      %20 = tpu.reciprocal %19 {approx = true} : vector<8x128xf32> -> vector<8x128xf32>
      %21 = arith.addf %19, %20 : vector<8x128xf32>
      %cst_10 = arith.constant 5.000000e-01 : f32
      %22 = vector.broadcast %cst_10 : f32 to vector<8x128xf32>
      %23 = arith.mulf %22, %21 : vector<8x128xf32>
      %24 = vector.shape_cast %23 : vector<8x128xf32> to vector<1x8x128xf32>
      %cst_11 = arith.constant dense<0.000000e+00> : vector<8x128xf32>
      %25 = vector.multi_reduction <add>, %24, %cst_11 [0] : vector<1x8x128xf32> to vector<8x128xf32>
      %26 = arith.addf %14, %25 : vector<8x128xf32>
      %27 = arith.addf %13, %26 : vector<8x128xf32>
      %c0_12 = arith.constant 0 : index
      %c0_13 = arith.constant 0 : index
      %28 = vector.load %arg4[%c0_12, %c0_13] : memref<8x128xf32, #tpu.memory_space<vmem>>, vector<8x128xf32>
      tpu.vector_store %arg4[%c0_12, %c0_13], %27 {strides = array<i32>} : memref<8x128xf32, #tpu.memory_space<vmem>>, vector<8x128xf32>,
    } else {
    }
    %true = arith.constant true
    %10 = arith.xori %7, %true : i1
    %11 = arith.extui %10 : i1 to i32
    %c0_i32_4 = arith.constant 0 : i32
    %12 = arith.cmpi ne, %11, %c0_i32_4 : i32
    scf.if %12 {
      %c0 = arith.constant 0 : index
      %c0_5 = arith.constant 0 : index
      %13 = vector.load %arg4[%c0, %c0_5] : memref<8x128xf32, #tpu.memory_space<vmem>>, vector<8x128xf32>
      %cst = arith.constant 0.000000e+00 : f32
      %14 = vector.broadcast %cst : f32 to vector<8x128xf32>
      %15 = tpu.iota {dimensions = array<i32: 0>} : vector<8x128xi32>
      %16 = tpu.iota {dimensions = array<i32: 1>} : vector<8x128xi32>
      %c0_i32_6 = arith.constant 0 : i32
      %17 = arith.addi %5, %c0_i32_6 : i32
      %18 = vector.broadcast %17 : i32 to vector<8x128xi32>
      %19 = arith.addi %18, %15 : vector<8x128xi32>
      %c0_i32_7 = arith.constant 0 : i32
      %20 = vector.broadcast %c0_i32_7 : i32 to vector<8x128xi32>
      %21 = arith.cmpi slt, %19, %20 : vector<8x128xi32>
      %c0_i32_8 = arith.constant 0 : i32
      %22 = vector.broadcast %c0_i32_8 : i32 to vector<8x128xi32>
      %23 = arith.cmpi eq, %19, %22 : vector<8x128xi32>
      %c40_i32 = arith.constant 40 : i32
      %24 = vector.broadcast %c40_i32 : i32 to vector<8x128xi32>
      %25 = arith.cmpi slt, %16, %24 : vector<8x128xi32>
      %26 = arith.andi %23, %25 : vector<8x128xi1>
      %27 = arith.ori %21, %26 : vector<8x128xi1>
      %c0_9 = arith.constant 0 : index
      %c0_10 = arith.constant 0 : index
      %28 = vector.load %arg2[%c0_9, %c0_10] : memref<8x128xf32, #tpu.memory_space<vmem>>, vector<8x128xf32>
      %c0_11 = arith.constant 0 : index
      %c0_12 = arith.constant 0 : index
      %29 = vector.load %arg3[%c0_11, %c0_12] : memref<8x128xf32, #tpu.memory_space<vmem>>, vector<8x128xf32>
      %30 = arith.subf %28, %29 : vector<8x128xf32>
      %31 = math.absf %30 : vector<8x128xf32>
      %32 = math.exp %31 : vector<8x128xf32>
      %33 = tpu.reciprocal %32 {approx = true} : vector<8x128xf32> -> vector<8x128xf32>
      %34 = arith.addf %32, %33 : vector<8x128xf32>
      %cst_13 = arith.constant 5.000000e-01 : f32
      %35 = vector.broadcast %cst_13 : f32 to vector<8x128xf32>
      %36 = arith.mulf %35, %34 : vector<8x128xf32>
      %cst_14 = arith.constant 0.000000e+00 : f32
      %37 = vector.broadcast %cst_14 : f32 to vector<8x128xf32>
      %38 = arith.select %27, %36, %37 : vector<8x128xi1>, vector<8x128xf32>
      %39 = vector.shape_cast %38 : vector<8x128xf32> to vector<1x8x128xf32>
      %cst_15 = arith.constant dense<0.000000e+00> : vector<8x128xf32>
      %40 = vector.multi_reduction <add>, %39, %cst_15 [0] : vector<1x8x128xf32> to vector<8x128xf32>
      %41 = arith.addf %14, %40 : vector<8x128xf32>
      %42 = arith.addf %13, %41 : vector<8x128xf32>
      %c0_16 = arith.constant 0 : index
      %c0_17 = arith.constant 0 : index
      %43 = vector.load %arg4[%c0_16, %c0_17] : memref<8x128xf32, #tpu.memory_space<vmem>>, vector<8x128xf32>
      tpu.vector_store %arg4[%c0_16, %c0_17], %42 {strides = array<i32>} : memref<8x128xf32, #tpu.memory_space<vmem>>, vector<8x128xf32>,
    } else {
    }
    return
  }
  func.func @transform_0(%arg0: i32, %arg1: i32) -> (i32, i32) {
    %c1_i32 = arith.constant 1 : i32
    %0 = arith.muli %arg0, %c1_i32 : i32
    %1 = arith.addi %0, %arg1 : i32
    %c0_i32 = arith.constant 0 : i32
    %c0_i32_0 = arith.constant 0 : i32
    return %1, %c0_i32 : i32, i32
  }
  func.func @transform_1(%arg0: i32, %arg1: i32) -> (i32, i32) {
    %c1_i32 = arith.constant 1 : i32
    %0 = arith.muli %arg0, %c1_i32 : i32
    %1 = arith.addi %0, %arg1 : i32
    %c0_i32 = arith.constant 0 : i32
    %c0_i32_0 = arith.constant 0 : i32
    return %1, %c0_i32 : i32, i32
  }
  func.func @transform_2(%arg0: i32, %arg1: i32) -> (i32, i32) {
    %c0_i32 = arith.constant 0 : i32
    %c0_i32_0 = arith.constant 0 : i32
    return %arg0, %c0_i32 : i32, i32
  }
}

</mosaic_0001>

<llo_original>
// kernel: tpu_custom_call.1
$region0: #{tpu_custom_call.1}
  #allocation0 [shape = 'u32[]', space=smem, size = 0x4, offset = 0x4, fixed_abs, tag = 'smem constant byte address 0x4 - core index']
  #allocation1 [shape = 'u32[144,128]{1,0:T(1,128)}', space=vmem, size = 0x12000, scoped, tag = 'internal scratch']
  %s0 = inlined_call_operand.hbm [shape: f32[8,128], index: 0, kind: input, shape index: {}]
  %s1 = inlined_call_operand.hbm [shape: f32[8,128], index: 1, kind: input, shape index: {}]
  %s2 = inlined_call_operand.hbm [shape: f32[8,128], index: 2, kind: output, shape index: {}]
  %s3 = sld [smem:[#allocation0]]
  $region38: #{tpu_custom_call.1} parent=0
    _
  %s5 = ssub.s32 1, %s3
  %s6 = scalar_select 0, %s5, %s3
  $region1: #{tpu_custom_call.1} parent=0
    #allocation2 [shape = 'u8[4096]{0}', space=vmem, size = 0x1000, scoped, tag = 'input window, operand 0, single buffered']
    #allocation3 [shape = 's32[1]{0}', space=sflag, size = 0x4, scoped, tag = 'scoped memory for tpu_custom_call.1']
    #allocation4 [shape = 's32[1]{0}', space=sflag, size = 0x4, scoped, tag = 'scoped memory for tpu_custom_call.1']
    #allocation5 [shape = 'u8[4096]{0}', space=vmem, size = 0x1000, scoped, tag = 'input window, operand 1, single buffered']
    #allocation6 [shape = 's32[1]{0}', space=sflag, size = 0x4, scoped, tag = 'scoped memory for tpu_custom_call.1']
    #allocation7 [shape = 'u8[4096]{0}', space=vmem, size = 0x1000, scoped, tag = 'output window, operand 0, single buffered']
    %7 = vsyncpa [#allocation3], 0
    %8 = vsyncpa [#allocation6], 0
    %9 = vsyncpa [#allocation4], 0
    // Predicated region
    $region2: #{tpu_custom_call.1} parent=1 // pred_check
      _
    $region3: #{tpu_custom_call.1} parent=1 // pred_check_branch
      %11 = sbr.rel (0) target = $region5
    $region4: #{tpu_custom_call.1} parent=1 // pred_region
      %s12 = sadd.s32 0, 0
      %s14 = ssub.s32 128, 128
      %15 = vsyncadd [#allocation3], %s14
      %s16 = smul.addr %s12, 128
      %s17 = scalar_lea.hbm %s0, %s16
      %s19 = sshll.u32 [#allocation2], 4
      %s20 = int_to_ptr.vmem [resolvable:$true] %s19
      %22 = dma.hbm_to_vmem [thread:$0]  %s17, 128, %s20, [#allocation3]
    $region5: #{tpu_custom_call.1} parent=1 // pred_fallthru
      _
    // Predicated region
    $region6: #{tpu_custom_call.1} parent=1 // pred_check
      _
    $region7: #{tpu_custom_call.1} parent=1 // pred_check_branch
      %24 = sbr.rel (0) target = $region9
    $region8: #{tpu_custom_call.1} parent=1 // pred_region
      %s25 = sadd.s32 0, 0
      %s27 = ssub.s32 128, 128
      %28 = vsyncadd [#allocation6], %s27
      %s29 = smul.addr %s25, 128
      %s30 = scalar_lea.hbm %s1, %s29
      %s32 = sshll.u32 [#allocation5], 4
      %s33 = int_to_ptr.vmem [resolvable:$true] %s32
      %35 = dma.hbm_to_vmem [thread:$0]  %s30, 128, %s33, [#allocation6]
    $region9: #{tpu_custom_call.1} parent=1 // pred_fallthru
      _
    // Predicated region
    $region10: #{tpu_custom_call.1} parent=1 // pred_check
      _
    $region11: #{tpu_custom_call.1} parent=1 // pred_check_branch
      %37 = sbr.rel (0) target = $region13
    $region12: #{tpu_custom_call.1} parent=1 // pred_region
      %38 = dma.done [#allocation3], 128
    $region13: #{tpu_custom_call.1} parent=1 // pred_fallthru
      _
    // Predicated region
    $region14: #{tpu_custom_call.1} parent=1 // pred_check
      _
    $region15: #{tpu_custom_call.1} parent=1 // pred_check_branch
      %40 = sbr.rel (0) target = $region17
    $region16: #{tpu_custom_call.1} parent=1 // pred_region
      %41 = dma.done [#allocation6], 128
    $region17: #{tpu_custom_call.1} parent=1 // pred_fallthru
      _
    %s42 = sadd.s32 0, 0
    %s43 = sadd.s32 0, 0
    %p44 = scmp.eq.s32.totalorder 0, 0
    // Predicated region
    $region18: #{tpu_custom_call.1} parent=1 // pred_check
      %p45 = pneg %p44
    $region19: #{tpu_custom_call.1} parent=1 // pred_check_branch
      %47 = sbr.rel (%p45) target = $region21
    $region20: #{tpu_custom_call.1} parent=1 // pred_region
      %48 = vst [vmem:[#allocation7] sm:$0xff] 0.0
    $region21: #{tpu_custom_call.1} parent=1 // pred_fallthru
      _
    %s49 = sadd.s32 0, 0
    %s50 = smul.u32 %s49, 8
    %s51 = sadd.s32 %s50, 8
    %p52 = scmp.le.s32.totalorder %s51, 0
    // Predicated region
    $region22: #{tpu_custom_call.1} parent=1 // pred_check
      %p53 = pneg %p52
    $region23: #{tpu_custom_call.1} parent=1 // pred_check_branch
      %55 = sbr.rel (%p53) target = $region25
    $region24: #{tpu_custom_call.1} parent=1 // pred_region
      %v56 = vld [vmem:[#allocation7] sm:$0xff]
      %v57 = vld [vmem:[#allocation2] sm:$0xff]
      %v58 = vld [vmem:[#allocation5] sm:$0xff]
      %v59 = vsub.f32 %v57, %v58
      %v60 = vand.u32 2147483647, %v59
      %v61 = vmul.f32 %v60, 1.442695
      %v62 = vpow.pop %v61
      %v63 = vrcp.pop %v62
      %v64 = vadd.f32 %v62, %v63
      %v65 = vmul.f32 %v64, 0.5
      %v66 = vadd.f32 %v65, 0.0
      %v67 = vadd.f32 %v66, 0.0
      %v68 = vadd.f32 %v56, %v67
      %69 = vst [vmem:[#allocation7] sm:$0xff] %v68
    $region25: #{tpu_custom_call.1} parent=1 // pred_fallthru
      _
    %p70 = scmp.gt.s32.totalorder %s51, 0
    // Predicated region
    $region26: #{tpu_custom_call.1} parent=1 // pred_check
      %p71 = pneg %p70
    $region27: #{tpu_custom_call.1} parent=1 // pred_check_branch
      %73 = sbr.rel (%p71) target = $region29
    $region28: #{tpu_custom_call.1} parent=1 // pred_region
      %v74 = vld [vmem:[#allocation7] sm:$0xff]
      %v75 = vlaneseq
      %v76 = vshrl.u32 %v75, 7
      %v77 = vlaneseq
      %v78 = vand.u32 %v77, 127
      %v79 = vstv %s50
      %v80 = vadd.s32 %v79, %v76
      %vm81 = vcmp.lt.s32.totalorder %v80, 0
      %vm82 = vcmp.eq.s32.totalorder %v80, 0
      %vm83 = vcmp.lt.s32.totalorder %v78, 40
      %vm84 = vmand %vm82, %vm83
      %vm85 = vmor %vm81, %vm84
      %v86 = vld [vmem:[#allocation2] sm:$0xff]
      %v87 = vld [vmem:[#allocation5] sm:$0xff]
      %v88 = vsub.f32 %v86, %v87
      %v89 = vand.u32 2147483647, %v88
      %v90 = vmul.f32 %v89, 1.442695
      %v91 = vpow.pop %v90
      %v92 = vrcp.pop %v91
      %v93 = vadd.f32 %v91, %v92
      %v94 = vmul.f32 %v93, 0.5
      %v95 = vsel %vm85, %v94, 0.0
      %v96 = vadd.f32 %v95, 0.0
      %v97 = vadd.f32 %v96, 0.0
      %v98 = vadd.f32 %v74, %v97
      %99 = vst [vmem:[#allocation7] sm:$0xff] %v98
    $region29: #{tpu_custom_call.1} parent=1 // pred_fallthru
      _
    // Predicated region
    $region30: #{tpu_custom_call.1} parent=1 // pred_check
      _
    $region31: #{tpu_custom_call.1} parent=1 // pred_check_branch
      %101 = sbr.rel (0) target = $region33
    $region32: #{tpu_custom_call.1} parent=1 // pred_region
      %s103 = ssub.s32 128, 128
      %104 = vsyncadd [#allocation4], %s103
      %s106 = sshll.u32 [#allocation7], 4
      %s107 = int_to_ptr.vmem [resolvable:$true] %s106
      %109 = dma.vmem_to_hbm [thread:$0]  %s107, 128, %s2, [#allocation4]
    $region33: #{tpu_custom_call.1} parent=1 // pred_fallthru
      _
    // Predicated region
    $region34: #{tpu_custom_call.1} parent=1 // pred_check
      _
    $region35: #{tpu_custom_call.1} parent=1 // pred_check_branch
      %111 = sbr.rel (0) target = $region37
    $region36: #{tpu_custom_call.1} parent=1 // pred_region
      %112 = dma.done [#allocation4], 128
    $region37: #{tpu_custom_call.1} parent=1 // pred_fallthru
      _
    %113 = vsyncpa [#allocation3], 1
    %114 = vsyncpa [#allocation6], 1
    %115 = vsyncpa [#allocation4], 1

</llo_original>
